<compile_context>
chip_gen: v7x
topology: tpu7x:2x2x1
jax: 0.10.0
libtpu: 0.0.40
codegen_flags: <defaults>
</compile_context>

<pallas_src>
import functools

import jax
import jax.numpy as jnp
from jax.experimental import pallas as pl
from jax.experimental.pallas import tpu as pltpu

IN_F = 512
HID_F = 128
OUT_F = 34
BN_EPS = 1e-5
MAX_TILE_B = 2048      # batch rows per grid step (VMEM-safe everywhere incl. v7x)


def _speaker_kernel(x_ref, w1_ref, b1_ref, w2_ref, b2_ref, o_ref):
    # fc1 with BN pre-folded: bf16 [TB, 512] @ bf16 [512, 128] -> f32, + f32 bias
    h = jnp.dot(x_ref[...], w1_ref[...], preferred_element_type=jnp.float32)
    h = h + b1_ref[...]
    # ReLU
    h = jnp.maximum(h, 0.0)
    # Dropout(p=0.3): identity in eval mode.
    # fc2: bf16 [TB, 128] @ bf16 [128, 34] -> f32, + f32 bias
    logits = jnp.dot(h.astype(jnp.bfloat16), w2_ref[...],
                     preferred_element_type=jnp.float32)
    logits = logits + b2_ref[...]
    # Numerically stable, exact sigmoid (EUP exp + VPU select/div; kernel is
    # DMA-bound so this is free).
    z = jnp.exp(-jnp.abs(logits))           # in (0, 1], never overflows
    p = z / (1.0 + z)                       # sigmoid(-|logits|)
    o_ref[...] = jnp.where(logits >= 0.0, 1.0 - p, p)


def fold_params(params):
    """One-time parameter prep: fold eval-mode BN into fc1, cast weights to bf16."""
    scale = params["gamma"] * jax.lax.rsqrt(params["running_var"] + BN_EPS)  # [1, 128]
    w1f = (params["w1"] * scale).astype(jnp.bfloat16)                        # [512, 128]
    b1f = ((params["b1"] - params["running_mean"]) * scale
           + params["beta"]).astype(jnp.float32)                             # [1, 128]
    w2f = params["w2"].astype(jnp.bfloat16)                                  # [128, 34]
    b2f = params["b2"].astype(jnp.float32)                                   # [1, 34]
    return dict(w1=w1f, b1=b1f, w2=w2f, b2=b2f)


def _round_up(n, m):
    return ((n + m - 1) // m) * m


def _choose_tile_b(B):
    """8-aligned batch tile; keep >=2 grid steps when B is big enough (v7x megacore)."""
    if B <= 8:
        return 8
    n_steps = pl.cdiv(B, MAX_TILE_B)
    if n_steps < 2 and B > 16:
        n_steps = 2          # ensure both v7x TensorCores get a grid step
    return min(MAX_TILE_B, _round_up(pl.cdiv(B, n_steps), 8))


@functools.partial(jax.jit, static_argnames=("tile_b",))
def _speaker_forward(x_bf16, w1, b1, w2, b2, *, tile_b):
    B = x_bf16.shape[0]
    grid = (pl.cdiv(B, tile_b),)

    cost = pl.CostEstimate(
        flops=2 * B * (IN_F * HID_F + HID_F * OUT_F),
        transcendentals=B * OUT_F,
        bytes_accessed=(2 * (B * IN_F + IN_F * HID_F + HID_F * OUT_F)   # bf16 streams
                        + 4 * (HID_F + OUT_F + B * OUT_F)),             # f32 biases/out
    )

    return pl.pallas_call(
        _speaker_kernel,
        out_shape=jax.ShapeDtypeStruct((B, OUT_F), jnp.float32),
        grid=grid,
        in_specs=[
            pl.BlockSpec((tile_b, IN_F), lambda i: (i, 0)),   # x: streamed per tile
            pl.BlockSpec((IN_F, HID_F), lambda i: (0, 0)),    # w1 (BN-folded): resident
            pl.BlockSpec((1, HID_F), lambda i: (0, 0)),       # b1: resident
            pl.BlockSpec((HID_F, OUT_F), lambda i: (0, 0)),   # w2: resident
            pl.BlockSpec((1, OUT_F), lambda i: (0, 0)),       # b2: resident
        ],
        out_specs=pl.BlockSpec((tile_b, OUT_F), lambda i: (i, 0)),
        compiler_params=pltpu.CompilerParams(
            dimension_semantics=("parallel",)),   # shards batch tiles across TCs on v7x
        cost_estimate=cost,
    )(x_bf16, w1, b1, w2, b2)


def speaker_embedding_forward(x, folded):
    """x: [B, 512].  folded: output of fold_params(). Returns [B, 34] float32."""
    B = x.shape[0]
    tile_b = _choose_tile_b(B)
    # Ideally the producer already emits bf16; the cast is a no-op in that case.
    x_bf16 = x.astype(jnp.bfloat16)
    return _speaker_forward(x_bf16, folded["w1"], folded["b1"],
                            folded["w2"], folded["b2"], tile_b=tile_b)


def init_params(key):
    """Deterministic synthetic parameters with the shapes implied by __init__."""
    ks = jax.random.split(key, 8)
    # nn.Linear(512, 128): weight [128, 512] -> stored transposed [512, 128]
    w1 = jax.random.normal(ks[0], (IN_F, HID_F), jnp.float32) * 0.02
    b1 = jax.random.normal(ks[1], (1, HID_F), jnp.float32) * 0.02
    # nn.BatchNorm1d(128): gamma, beta, running_mean, running_var
    gamma = 1.0 + 0.1 * jax.random.normal(ks[2], (1, HID_F), jnp.float32)
    beta = 0.1 * jax.random.normal(ks[3], (1, HID_F), jnp.float32)
    running_mean = 0.05 * jax.random.normal(ks[4], (1, HID_F), jnp.float32)
    running_var = jnp.abs(1.0 + 0.1 * jax.random.normal(ks[5], (1, HID_F), jnp.float32))
    # nn.Linear(128, 34): weight [34, 128] -> stored transposed [128, 34]
    w2 = jax.random.normal(ks[6], (HID_F, OUT_F), jnp.float32) * 0.05
    b2 = jax.random.normal(ks[7], (1, OUT_F), jnp.float32) * 0.05
    return dict(w1=w1, b1=b1, gamma=gamma, beta=beta,
                running_mean=running_mean, running_var=running_var,
                w2=w2, b2=b2)


def reference_forward(x, p):
    """Plain-JAX f32 reference of the eval-mode forward (unfolded params)."""
    h = x @ p["w1"] + p["b1"]
    h = (h - p["running_mean"]) * jax.lax.rsqrt(p["running_var"] + BN_EPS) \
        * p["gamma"] + p["beta"]
    h = jnp.maximum(h, 0.0)
    return jax.nn.sigmoid(h @ p["w2"] + p["b2"])


if __name__ == "__main__":
    key = jax.random.PRNGKey(0)
    k_param, k_x = jax.random.split(key)
    params = init_params(k_param)
    folded = fold_params(params)

    B = 8  # small, sublane-aligned demo batch
    x = jax.random.normal(k_x, (B, IN_F), jnp.float32)

    out = speaker_embedding_forward(x, folded)
    out = jax.block_until_ready(out)

    ref = reference_forward(x, params)
    assert out.shape == (B, OUT_F), out.shape
    # Tolerance accounts for bf16 activations/weights in the two matmuls.
    assert jnp.allclose(out, ref, atol=2e-2, rtol=2e-2), "mismatch vs reference"

    print("KERNEL_OK")
</pallas_src>

<mosaic_0001>
module attributes {stable_mosaic.version = 11 : i64} {
  func.func @_speaker_kernel(%arg0: i32, %arg1: memref<8x512xbf16, #tpu.memory_space<vmem>>, %arg2: memref<512x128xbf16, #tpu.memory_space<vmem>>, %arg3: memref<1x128xf32, #tpu.memory_space<vmem>>, %arg4: memref<128x34xbf16, #tpu.memory_space<vmem>>, %arg5: memref<1x34xf32, #tpu.memory_space<vmem>>, %arg6: memref<8x34xf32, #tpu.memory_space<vmem>>) attributes {dimension_semantics = [#tpu.dimension_semantics<parallel>], iteration_bounds = array<i64: 1>, scalar_prefetch = 0 : i64, scratch_operands = 0 : i64, tpu.core_type = #tpu.core_type<tc>, window_params = [{transform_indices = @transform_0, window_bounds = array<i64: 8, 512>}, {pipeline_mode = #tpu.pipeline_mode<synchronous>, transform_indices = @transform_1, window_bounds = array<i64: 512, 128>}, {pipeline_mode = #tpu.pipeline_mode<synchronous>, transform_indices = @transform_2, window_bounds = array<i64: 1, 128>}, {pipeline_mode = #tpu.pipeline_mode<synchronous>, transform_indices = @transform_3, window_bounds = array<i64: 128, 34>}, {pipeline_mode = #tpu.pipeline_mode<synchronous>, transform_indices = @transform_4, window_bounds = array<i64: 1, 34>}, {transform_indices = @transform_5, window_bounds = array<i64: 8, 34>}]} {
    %c0 = arith.constant 0 : index
    %c0_0 = arith.constant 0 : index
    %0 = vector.load %arg1[%c0, %c0_0] : memref<8x512xbf16, #tpu.memory_space<vmem>>, vector<8x512xbf16>
    %c0_1 = arith.constant 0 : index
    %c0_2 = arith.constant 0 : index
    %1 = vector.load %arg2[%c0_1, %c0_2] : memref<512x128xbf16, #tpu.memory_space<vmem>>, vector<512x128xbf16>
    %cst = arith.constant dense<0.000000e+00> : vector<8x128xf32>
    %2 = tpu.matmul %0, %1, %cst {dimension_numbers = #tpu.dot_dimension_numbers<[1], [0], [0], [1], [0, 0, 1, 1], [], []>} : vector<8x512xbf16>, vector<512x128xbf16>, vector<8x128xf32> -> vector<8x128xf32>
    %c0_3 = arith.constant 0 : index
    %c0_4 = arith.constant 0 : index
    %3 = vector.load %arg3[%c0_3, %c0_4] : memref<1x128xf32, #tpu.memory_space<vmem>>, vector<1x128xf32>
    %4 = vector.broadcast %3 : vector<1x128xf32> to vector<8x128xf32>
    %5 = arith.addf %2, %4 : vector<8x128xf32>
    %cst_5 = arith.constant 0.000000e+00 : f32
    %6 = vector.broadcast %cst_5 : f32 to vector<8x128xf32>
    %7 = arith.maximumf %5, %6 : vector<8x128xf32>
    %8 = arith.truncf %7 : vector<8x128xf32> to vector<8x128xbf16>
    %c0_6 = arith.constant 0 : index
    %c0_7 = arith.constant 0 : index
    %9 = vector.load %arg4[%c0_6, %c0_7] : memref<128x34xbf16, #tpu.memory_space<vmem>>, vector<128x34xbf16>
    %cst_8 = arith.constant dense<0.000000e+00> : vector<8x34xf32>
    %10 = tpu.matmul %8, %9, %cst_8 {dimension_numbers = #tpu.dot_dimension_numbers<[1], [0], [0], [1], [0, 0, 1, 1], [], []>} : vector<8x128xbf16>, vector<128x34xbf16>, vector<8x34xf32> -> vector<8x34xf32>
    %c0_9 = arith.constant 0 : index
    %c0_10 = arith.constant 0 : index
    %11 = vector.load %arg5[%c0_9, %c0_10] : memref<1x34xf32, #tpu.memory_space<vmem>>, vector<1x34xf32>
    %12 = vector.broadcast %11 : vector<1x34xf32> to vector<8x34xf32>
    %13 = arith.addf %10, %12 : vector<8x34xf32>
    %14 = math.absf %13 : vector<8x34xf32>
    %cst_11 = arith.constant 0.000000e+00 : f32
    %15 = vector.broadcast %cst_11 : f32 to vector<8x34xf32>
    %16 = arith.subf %15, %14 : vector<8x34xf32>
    %17 = math.exp %16 : vector<8x34xf32>
    %cst_12 = arith.constant 1.000000e+00 : f32
    %18 = vector.broadcast %cst_12 : f32 to vector<8x34xf32>
    %19 = arith.addf %18, %17 : vector<8x34xf32>
    %20 = arith.divf %17, %19 : vector<8x34xf32>
    %cst_13 = arith.constant 0.000000e+00 : f32
    %21 = vector.broadcast %cst_13 : f32 to vector<8x34xf32>
    %22 = arith.cmpf oge, %13, %21 : vector<8x34xf32>
    %cst_14 = arith.constant 1.000000e+00 : f32
    %23 = vector.broadcast %cst_14 : f32 to vector<8x34xf32>
    %24 = arith.subf %23, %20 : vector<8x34xf32>
    %25 = arith.select %22, %24, %20 : vector<8x34xi1>, vector<8x34xf32>
    %c0_15 = arith.constant 0 : index
    %c0_16 = arith.constant 0 : index
    %26 = vector.load %arg6[%c0_15, %c0_16] : memref<8x34xf32, #tpu.memory_space<vmem>>, vector<8x34xf32>
    tpu.vector_store %arg6[%c0_15, %c0_16], %25 {strides = array<i32>} : memref<8x34xf32, #tpu.memory_space<vmem>>, vector<8x34xf32>,
    return
  }
  func.func @transform_0(%arg0: i32) -> (i32, i32) {
    %c0_i32 = arith.constant 0 : i32
    %c0_i32_0 = arith.constant 0 : i32
    return %arg0, %c0_i32 : i32, i32
  }
  func.func @transform_1(%arg0: i32) -> (i32, i32) {
    %c0_i32 = arith.constant 0 : i32
    %c0_i32_0 = arith.constant 0 : i32
    %c0_i32_1 = arith.constant 0 : i32
    return %c0_i32, %c0_i32_0 : i32, i32
  }
  func.func @transform_2(%arg0: i32) -> (i32, i32) {
    %c0_i32 = arith.constant 0 : i32
    %c0_i32_0 = arith.constant 0 : i32
    %c0_i32_1 = arith.constant 0 : i32
    return %c0_i32, %c0_i32_0 : i32, i32
  }
  func.func @transform_3(%arg0: i32) -> (i32, i32) {
    %c0_i32 = arith.constant 0 : i32
    %c0_i32_0 = arith.constant 0 : i32
    %c0_i32_1 = arith.constant 0 : i32
    return %c0_i32, %c0_i32_0 : i32, i32
  }
  func.func @transform_4(%arg0: i32) -> (i32, i32) {
    %c0_i32 = arith.constant 0 : i32
    %c0_i32_0 = arith.constant 0 : i32
    %c0_i32_1 = arith.constant 0 : i32
    return %c0_i32, %c0_i32_0 : i32, i32
  }
  func.func @transform_5(%arg0: i32) -> (i32, i32) {
    %c0_i32 = arith.constant 0 : i32
    %c0_i32_0 = arith.constant 0 : i32
    return %arg0, %c0_i32 : i32, i32
  }
}

</mosaic_0001>

<llo_original>
// kernel: _speaker_forward.1
$region0: #{_speaker_forward.1}
  #allocation0 [shape = 'u32[]', space=smem, size = 0x4, offset = 0x4, fixed_abs, tag = 'smem constant byte address 0x4 - core index']
  #allocation1 [shape = 'u32[144,128]{1,0:T(1,128)}', space=vmem, size = 0x12000, scoped, tag = 'internal scratch']
  %s0 = inlined_call_operand.vmem [shape: bf16[8,512], index: 0, kind: input, shape index: {}]
  %s1 = inlined_call_operand.hbm [shape: bf16[512,128], index: 1, kind: input, shape index: {}]
  %s2 = inlined_call_operand.vmem [shape: f32[1,128], index: 2, kind: input, shape index: {}]
  %s3 = inlined_call_operand.vmem [shape: bf16[128,34], index: 3, kind: input, shape index: {}]
  %s4 = inlined_call_operand.vmem [shape: f32[1,34], index: 4, kind: input, shape index: {}]
  %s5 = inlined_call_operand.hbm [shape: f32[8,34], index: 5, kind: output, shape index: {}]
  %s6 = sld [smem:[#allocation0]]
  $region34: #{_speaker_forward.1} parent=0
    _
  %s8 = ssub.s32 1, %s6
  %s9 = scalar_select 0, %s8, %s6
  $region1: #{_speaker_forward.1} parent=0
    #allocation2 [shape = 'u8[131072]{0}', space=vmem, size = 0x20000, scoped, tag = 'input window, operand 1, single buffered']
    #allocation3 [shape = 's32[1]{0}', space=sflag, size = 0x4, scoped, tag = 'scoped memory for _speaker_forward.1']
    #allocation4 [shape = 's32[1]{0}', space=sflag, size = 0x4, scoped, tag = 'scoped memory for _speaker_forward.1']
    #allocation5 [shape = 'u8[4096]{0}', space=vmem, size = 0x1000, scoped, tag = 'output window, operand 0, single buffered']
    %10 = vsyncpa [#allocation3], 0
    %11 = vsyncpa [#allocation4], 0
    // Predicated region
    $region2: #{_speaker_forward.1} parent=1 // pred_check
      _
    $region3: #{_speaker_forward.1} parent=1 // pred_check_branch
      %13 = sbr.rel (0) target = $region5
    $region4: #{_speaker_forward.1} parent=1 // pred_region
      _
    $region5: #{_speaker_forward.1} parent=1 // pred_fallthru
      _
    // Predicated region
    $region6: #{_speaker_forward.1} parent=1 // pred_check
      _
    $region7: #{_speaker_forward.1} parent=1 // pred_check_branch
      %15 = sbr.rel (0) target = $region9
    $region8: #{_speaker_forward.1} parent=1 // pred_region
      %s17 = ssub.s32 4096, 4096
      %18 = vsyncadd [#allocation3], %s17
      %s19 = sshll.u32 [#allocation2], 4
      %s20 = int_to_ptr.vmem [resolvable:$true] %s19
      %25 = dma.hbm_to_vmem [thread:$0]  %s1, 4096, %s20, [#allocation3], 64, 64, 4
    $region9: #{_speaker_forward.1} parent=1 // pred_fallthru
      _
    // Predicated region
    $region10: #{_speaker_forward.1} parent=1 // pred_check
      _
    $region11: #{_speaker_forward.1} parent=1 // pred_check_branch
      %27 = sbr.rel (0) target = $region13
    $region12: #{_speaker_forward.1} parent=1 // pred_region
      _
    $region13: #{_speaker_forward.1} parent=1 // pred_fallthru
      _
    // Predicated region
    $region14: #{_speaker_forward.1} parent=1 // pred_check
      _
    $region15: #{_speaker_forward.1} parent=1 // pred_check_branch
      %29 = sbr.rel (0) target = $region17
    $region16: #{_speaker_forward.1} parent=1 // pred_region
      _
    $region17: #{_speaker_forward.1} parent=1 // pred_fallthru
      _
    // Predicated region
    $region18: #{_speaker_forward.1} parent=1 // pred_check
      _
    $region19: #{_speaker_forward.1} parent=1 // pred_check_branch
      %31 = sbr.rel (0) target = $region21
    $region20: #{_speaker_forward.1} parent=1 // pred_region
      _
    $region21: #{_speaker_forward.1} parent=1 // pred_fallthru
      _
    // Predicated region
    $region22: #{_speaker_forward.1} parent=1 // pred_check
      _
    $region23: #{_speaker_forward.1} parent=1 // pred_check_branch
      %33 = sbr.rel (0) target = $region25
    $region24: #{_speaker_forward.1} parent=1 // pred_region
      %34 = dma.done [#allocation3], 4096
    $region25: #{_speaker_forward.1} parent=1 // pred_fallthru
      _
    %v36 = vld [vmem:[%s0] sm:$0xff]
    %v37 = vld [vmem:[%s0 + $0x8] sm:$0xff]
    %v38 = vld [vmem:[#allocation2] sm:$0xf]
    %v39 = vld [vmem:[#allocation2 + $0x4] sm:$0xf]
    %v40 = vld [vmem:[#allocation2 + $0x8] sm:$0xf]
    %v41 = vld [vmem:[#allocation2 + $0xc] sm:$0xf]
    %v42 = vld [vmem:[#allocation2 + $0x10] sm:$0xf]
    %v43 = vld [vmem:[#allocation2 + $0x14] sm:$0xf]
    %v44 = vld [vmem:[#allocation2 + $0x18] sm:$0xf]
    %v45 = vld [vmem:[#allocation2 + $0x1c] sm:$0xf]
    %v46 = vld [vmem:[#allocation2 + $0x20] sm:$0xf]
    %v47 = vld [vmem:[#allocation2 + $0x24] sm:$0xf]
    %v48 = vld [vmem:[#allocation2 + $0x28] sm:$0xf]
    %v49 = vld [vmem:[#allocation2 + $0x2c] sm:$0xf]
    %v50 = vld [vmem:[#allocation2 + $0x30] sm:$0xf]
    %v51 = vld [vmem:[#allocation2 + $0x34] sm:$0xf]
    %v52 = vld [vmem:[#allocation2 + $0x38] sm:$0xf]
    %v53 = vld [vmem:[#allocation2 + $0x3c] sm:$0xf]
    %v54 = vld [vmem:[#allocation2 + $0x40] sm:$0xf]
    %v55 = vld [vmem:[#allocation2 + $0x44] sm:$0xf]
    %v56 = vld [vmem:[#allocation2 + $0x48] sm:$0xf]
    %v57 = vld [vmem:[#allocation2 + $0x4c] sm:$0xf]
    %v58 = vld [vmem:[#allocation2 + $0x50] sm:$0xf]
    %v59 = vld [vmem:[#allocation2 + $0x54] sm:$0xf]
    %v60 = vld [vmem:[#allocation2 + $0x58] sm:$0xf]
    %v61 = vld [vmem:[#allocation2 + $0x5c] sm:$0xf]
    %v62 = vld [vmem:[#allocation2 + $0x60] sm:$0xf]
    %v63 = vld [vmem:[#allocation2 + $0x64] sm:$0xf]
    %v64 = vld [vmem:[#allocation2 + $0x68] sm:$0xf]
    %v65 = vld [vmem:[#allocation2 + $0x6c] sm:$0xf]
    %v66 = vld [vmem:[#allocation2 + $0x70] sm:$0xf]
    %v67 = vld [vmem:[#allocation2 + $0x74] sm:$0xf]
    %v68 = vld [vmem:[#allocation2 + $0x78] sm:$0xf]
    %v69 = vld [vmem:[#allocation2 + $0x7c] sm:$0xf]
    %v70 = vld [vmem:[#allocation2 + $0x80] sm:$0xf]
    %v71 = vld [vmem:[#allocation2 + $0x84] sm:$0xf]
    %v72 = vld [vmem:[#allocation2 + $0x88] sm:$0xf]
    %v73 = vld [vmem:[#allocation2 + $0x8c] sm:$0xf]
    %v74 = vld [vmem:[#allocation2 + $0x90] sm:$0xf]
    %v75 = vld [vmem:[#allocation2 + $0x94] sm:$0xf]
    %v76 = vld [vmem:[#allocation2 + $0x98] sm:$0xf]
    %v77 = vld [vmem:[#allocation2 + $0x9c] sm:$0xf]
    %v78 = vld [vmem:[#allocation2 + $0xa0] sm:$0xf]
    %v79 = vld [vmem:[#allocation2 + $0xa4] sm:$0xf]
    %v80 = vld [vmem:[#allocation2 + $0xa8] sm:$0xf]
    %v81 = vld [vmem:[#allocation2 + $0xac] sm:$0xf]
    %v82 = vld [vmem:[#allocation2 + $0xb0] sm:$0xf]
    %v83 = vld [vmem:[#allocation2 + $0xb4] sm:$0xf]
    %v84 = vld [vmem:[#allocation2 + $0xb8] sm:$0xf]
    %v85 = vld [vmem:[#allocation2 + $0xbc] sm:$0xf]
    %v86 = vld [vmem:[#allocation2 + $0xc0] sm:$0xf]
    %v87 = vld [vmem:[#allocation2 + $0xc4] sm:$0xf]
    %v88 = vld [vmem:[#allocation2 + $0xc8] sm:$0xf]
    %v89 = vld [vmem:[#allocation2 + $0xcc] sm:$0xf]
    %v90 = vld [vmem:[#allocation2 + $0xd0] sm:$0xf]
    %v91 = vld [vmem:[#allocation2 + $0xd4] sm:$0xf]
    %v92 = vld [vmem:[#allocation2 + $0xd8] sm:$0xf]
    %v93 = vld [vmem:[#allocation2 + $0xdc] sm:$0xf]
    %v94 = vld [vmem:[#allocation2 + $0xe0] sm:$0xf]
    %v95 = vld [vmem:[#allocation2 + $0xe4] sm:$0xf]
    %v96 = vld [vmem:[#allocation2 + $0xe8] sm:$0xf]
    %v97 = vld [vmem:[#allocation2 + $0xec] sm:$0xf]
    %v98 = vld [vmem:[#allocation2 + $0xf0] sm:$0xf]
    %v99 = vld [vmem:[#allocation2 + $0xf4] sm:$0xf]
    %v100 = vld [vmem:[#allocation2 + $0xf8] sm:$0xf]
    %v101 = vld [vmem:[#allocation2 + $0xfc] sm:$0xf]
    %v102 = vld [vmem:[%s2] sm:$0x1]
    %v104 = vlaneseq
    %v105 = vshrl.u32 %v104, 7
    %v106 = vsub.s32 0, %v105
    %v107 = vrot.slane %v102, %v106
    %v111 = vunpack.c.l.b16 %v36
    %v112 = vunpack.c.h.b16 %v36
    %v113 = vunpack.c.l.b16 %v37
    %v114 = vunpack.c.h.b16 %v37
    %v115 = vpack.c.b16 %v111, %v111
    %v116 = vpack.c.b16 %v112, %v112
    %v117 = vpack.c.b16 %v113, %v113
    %v118 = vpack.c.b16 %v114, %v114
    %v187 = vunpack.c.l.b16 %v38
    %v188 = vunpack.c.l.b16 %v39
    %v189 = vunpack.c.l.b16 %v40
    %v190 = vunpack.c.l.b16 %v41
    %v191 = vunpack.c.l.b16 %v42
    %v192 = vunpack.c.l.b16 %v43
    %v193 = vunpack.c.l.b16 %v44
    %v194 = vunpack.c.l.b16 %v45
    %v195 = vunpack.c.l.b16 %v46
    %v196 = vunpack.c.l.b16 %v47
    %v197 = vunpack.c.l.b16 %v48
    %v198 = vunpack.c.l.b16 %v49
    %v199 = vunpack.c.l.b16 %v50
    %v200 = vunpack.c.l.b16 %v51
    %v201 = vunpack.c.l.b16 %v52
    %v202 = vunpack.c.l.b16 %v53
    %v203 = vunpack.c.l.b16 %v54
    %v204 = vunpack.c.l.b16 %v55
    %v205 = vunpack.c.l.b16 %v56
    %v206 = vunpack.c.l.b16 %v57
    %v207 = vunpack.c.l.b16 %v58
    %v208 = vunpack.c.l.b16 %v59
    %v209 = vunpack.c.l.b16 %v60
    %v210 = vunpack.c.l.b16 %v61
    %v211 = vunpack.c.l.b16 %v62
    %v212 = vunpack.c.l.b16 %v63
    %v213 = vunpack.c.l.b16 %v64
    %v214 = vunpack.c.l.b16 %v65
    %v215 = vunpack.c.l.b16 %v66
    %v216 = vunpack.c.l.b16 %v67
    %v217 = vunpack.c.l.b16 %v68
    %v218 = vunpack.c.l.b16 %v69
    %v219 = vunpack.c.l.b16 %v70
    %v220 = vunpack.c.l.b16 %v71
    %v221 = vunpack.c.l.b16 %v72
    %v222 = vunpack.c.l.b16 %v73
    %v223 = vunpack.c.l.b16 %v74
    %v224 = vunpack.c.l.b16 %v75
    %v225 = vunpack.c.l.b16 %v76
    %v226 = vunpack.c.l.b16 %v77
    %v227 = vunpack.c.l.b16 %v78
    %v228 = vunpack.c.l.b16 %v79
    %v229 = vunpack.c.l.b16 %v80
    %v230 = vunpack.c.l.b16 %v81
    %v231 = vunpack.c.l.b16 %v82
    %v232 = vunpack.c.l.b16 %v83
    %v233 = vunpack.c.l.b16 %v84
    %v234 = vunpack.c.l.b16 %v85
    %v235 = vunpack.c.l.b16 %v86
    %v236 = vunpack.c.l.b16 %v87
    %v237 = vunpack.c.l.b16 %v88
    %v238 = vunpack.c.l.b16 %v89
    %v239 = vunpack.c.l.b16 %v90
    %v240 = vunpack.c.l.b16 %v91
    %v241 = vunpack.c.l.b16 %v92
    %v242 = vunpack.c.l.b16 %v93
    %v243 = vunpack.c.l.b16 %v94
    %v244 = vunpack.c.l.b16 %v95
    %v245 = vunpack.c.l.b16 %v96
    %v246 = vunpack.c.l.b16 %v97
    %v247 = vunpack.c.l.b16 %v98
    %v248 = vunpack.c.l.b16 %v99
    %v249 = vunpack.c.l.b16 %v100
    %v250 = vunpack.c.l.b16 %v101
    %v251 = vpack.c.b16 %v188, %v187
    %v252 = vpack.c.b16 %v190, %v189
    %v253 = vpack.c.b16 %v192, %v191
    %v254 = vpack.c.b16 %v194, %v193
    %v255 = vpack.c.b16 %v196, %v195
    %v256 = vpack.c.b16 %v198, %v197
    %v257 = vpack.c.b16 %v200, %v199
    %v258 = vpack.c.b16 %v202, %v201
    %v259 = vpack.c.b16 %v204, %v203
    %v260 = vpack.c.b16 %v206, %v205
    %v261 = vpack.c.b16 %v208, %v207
    %v262 = vpack.c.b16 %v210, %v209
    %v263 = vpack.c.b16 %v212, %v211
    %v264 = vpack.c.b16 %v214, %v213
    %v265 = vpack.c.b16 %v216, %v215
    %v266 = vpack.c.b16 %v218, %v217
    %v267 = vpack.c.b16 %v220, %v219
    %v268 = vpack.c.b16 %v222, %v221
    %v269 = vpack.c.b16 %v224, %v223
    %v270 = vpack.c.b16 %v226, %v225
    %v271 = vpack.c.b16 %v228, %v227
    %v272 = vpack.c.b16 %v230, %v229
    %v273 = vpack.c.b16 %v232, %v231
    %v274 = vpack.c.b16 %v234, %v233
    %v275 = vpack.c.b16 %v236, %v235
    %v276 = vpack.c.b16 %v238, %v237
    %v277 = vpack.c.b16 %v240, %v239
    %v278 = vpack.c.b16 %v242, %v241
    %v279 = vpack.c.b16 %v244, %v243
    %v280 = vpack.c.b16 %v246, %v245
    %v281 = vpack.c.b16 %v248, %v247
    %v282 = vpack.c.b16 %v250, %v249
    %315 = vmatprep.subr.bf16.mxu0 0
    %316 = vmatpush1.bf16.msra.mxu0 %v251
    %317 = vmatprep.subr.bf16.mxu0 0
    %318 = vmatpush1.bf16.msra.mxu0 %v252
    %319 = vmatprep.subr.bf16.mxu0 0
    %320 = vmatpush1.bf16.msra.mxu0 %v253
    %321 = vmatprep.subr.bf16.mxu0 0
    %322 = vmatpush1.bf16.msra.mxu0 %v254
    %323 = vmatprep.subr.bf16.mxu0 0
    %324 = vmatpush1.bf16.msra.mxu0 %v255
    %325 = vmatprep.subr.bf16.mxu0 0
    %326 = vmatpush1.bf16.msra.mxu0 %v256
    %327 = vmatprep.subr.bf16.mxu0 0
    %328 = vmatpush1.bf16.msra.mxu0 %v257
    %329 = vmatprep.subr.bf16.mxu0 0
    %330 = vmatpush1.bf16.msra.mxu0 %v258
    %331 = vmatprep.subr.bf16.mxu0 0
    %332 = vmatpush1.bf16.msra.mxu0 %v259
    %333 = vmatprep.subr.bf16.mxu0 0
    %334 = vmatpush1.bf16.msra.mxu0 %v260
    %335 = vmatprep.subr.bf16.mxu0 0
    %336 = vmatpush1.bf16.msra.mxu0 %v261
    %337 = vmatprep.subr.bf16.mxu0 0
    %338 = vmatpush1.bf16.msra.mxu0 %v262
    %339 = vmatprep.subr.bf16.mxu0 0
    %340 = vmatpush1.bf16.msra.mxu0 %v263
    %341 = vmatprep.subr.bf16.mxu0 0
    %342 = vmatpush1.bf16.msra.mxu0 %v264
    %343 = vmatprep.subr.bf16.mxu0 0
    %344 = vmatpush1.bf16.msra.mxu0 %v265
    %345 = vmatprep.subr.bf16.mxu0 0
    %346 = vmatpush1.bf16.msra.mxu0 %v266
    %347 = vmatprep.mubr.bf16.mxu0 %v116
    %348 = vmatmul.mubr.bf16.gmra.mrb[0].mxu0 %v115
    %v349 = vpop.f32.mrb[0].mxu0
    %v350 = vadd.f32 %v107, %v349
    %v351 = vpop.f32.mrb[0].mxu0
    %v352 = vpop.f32.mrb[0].mxu0
    %v353 = vpop.f32.mrb[0].mxu0
    %354 = vdwg.mxu0
    %355 = vmatprep.subr.bf16.mxu0 0
    %356 = vmatpush1.bf16.msra.mxu0 %v267
    %357 = vmatprep.subr.bf16.mxu0 0
    %358 = vmatpush1.bf16.msra.mxu0 %v268
    %359 = vmatprep.subr.bf16.mxu0 0
    %360 = vmatpush1.bf16.msra.mxu0 %v269
    %361 = vmatprep.subr.bf16.mxu0 0
    %362 = vmatpush1.bf16.msra.mxu0 %v270
    %363 = vmatprep.subr.bf16.mxu0 0
    %364 = vmatpush1.bf16.msra.mxu0 %v271
    %365 = vmatprep.subr.bf16.mxu0 0
    %366 = vmatpush1.bf16.msra.mxu0 %v272
    %367 = vmatprep.subr.bf16.mxu0 0
    %368 = vmatpush1.bf16.msra.mxu0 %v273
    %369 = vmatprep.subr.bf16.mxu0 0
    %370 = vmatpush1.bf16.msra.mxu0 %v274
    %371 = vmatprep.subr.bf16.mxu0 0
    %372 = vmatpush1.bf16.msra.mxu0 %v275
    %373 = vmatprep.subr.bf16.mxu0 0
    %374 = vmatpush1.bf16.msra.mxu0 %v276
    %375 = vmatprep.subr.bf16.mxu0 0
    %376 = vmatpush1.bf16.msra.mxu0 %v277
    %377 = vmatprep.subr.bf16.mxu0 0
    %378 = vmatpush1.bf16.msra.mxu0 %v278
    %379 = vmatprep.subr.bf16.mxu0 0
    %380 = vmatpush1.bf16.msra.mxu0 %v279
    %381 = vmatprep.subr.bf16.mxu0 0
    %382 = vmatpush1.bf16.msra.mxu0 %v280
    %383 = vmatprep.subr.bf16.mxu0 0
    %384 = vmatpush1.bf16.msra.mxu0 %v281
    %385 = vmatprep.subr.bf16.mxu0 0
    %386 = vmatpush1.bf16.msra.mxu0 %v282
    %387 = vmatprep.mubr.bf16.mxu0 %v118
    %388 = vmatmul.mubr.bf16.gmra.mrb[0].mxu0 %v117
    %v389 = vpop.f32.mrb[0].mxu0
    %v390 = vadd.f32 %v350, %v389
    %v391 = vpop.f32.mrb[0].mxu0
    %v392 = vpop.f32.mrb[0].mxu0
    %v393 = vpop.f32.mrb[0].mxu0
    %394 = vdwg.mxu0
    %v395 = vmax.f32 %v390, 0.0
    %v396 = vpack.c.bf16 %v395, %v395
    %v397 = vld [vmem:[%s3] sm:$0xf]
    %v398 = vld [vmem:[%s3 + $0x4] sm:$0xf]
    %v399 = vld [vmem:[%s3 + $0x8] sm:$0xf]
    %v400 = vld [vmem:[%s3 + $0xc] sm:$0xf]
    %v401 = vld [vmem:[%s3 + $0x10] sm:$0xf]
    %v402 = vld [vmem:[%s3 + $0x14] sm:$0xf]
    %v403 = vld [vmem:[%s3 + $0x18] sm:$0xf]
    %v404 = vld [vmem:[%s3 + $0x1c] sm:$0xf]
    %v405 = vld [vmem:[%s3 + $0x20] sm:$0xf]
    %v406 = vld [vmem:[%s3 + $0x24] sm:$0xf]
    %v407 = vld [vmem:[%s3 + $0x28] sm:$0xf]
    %v408 = vld [vmem:[%s3 + $0x2c] sm:$0xf]
    %v409 = vld [vmem:[%s3 + $0x30] sm:$0xf]
    %v410 = vld [vmem:[%s3 + $0x34] sm:$0xf]
    %v411 = vld [vmem:[%s3 + $0x38] sm:$0xf]
    %v412 = vld [vmem:[%s3 + $0x3c] sm:$0xf]
    %v413 = vld [vmem:[%s4] sm:$0x1]
    %v415 = vlaneseq
    %v416 = vshrl.u32 %v415, 7
    %v417 = vsub.s32 0, %v416
    %v418 = vrot.slane %v413, %v417
    %v436 = vunpack.c.l.b16 %v397
    %v437 = vunpack.c.l.b16 %v398
    %v438 = vunpack.c.l.b16 %v399
    %v439 = vunpack.c.l.b16 %v400
    %v440 = vunpack.c.l.b16 %v401
    %v441 = vunpack.c.l.b16 %v402
    %v442 = vunpack.c.l.b16 %v403
    %v443 = vunpack.c.l.b16 %v404
    %v444 = vunpack.c.l.b16 %v405
    %v445 = vunpack.c.l.b16 %v406
    %v446 = vunpack.c.l.b16 %v407
    %v447 = vunpack.c.l.b16 %v408
    %v448 = vunpack.c.l.b16 %v409
    %v449 = vunpack.c.l.b16 %v410
    %v450 = vunpack.c.l.b16 %v411
    %v451 = vunpack.c.l.b16 %v412
    %v452 = vpack.c.b16 %v437, %v436
    %v453 = vpack.c.b16 %v439, %v438
    %v454 = vpack.c.b16 %v441, %v440
    %v455 = vpack.c.b16 %v443, %v442
    %v456 = vpack.c.b16 %v445, %v444
    %v457 = vpack.c.b16 %v447, %v446
    %v458 = vpack.c.b16 %v449, %v448
    %v459 = vpack.c.b16 %v451, %v450
    %468 = vmatprep.subr.bf16.mxu0 0
    %469 = vmatpush1.bf16.msra.mxu0 %v452
    %470 = vmatprep.subr.bf16.mxu0 0
    %471 = vmatpush1.bf16.msra.mxu0 %v453
    %472 = vmatprep.subr.bf16.mxu0 0
    %473 = vmatpush1.bf16.msra.mxu0 %v454
    %474 = vmatprep.subr.bf16.mxu0 0
    %475 = vmatpush1.bf16.msra.mxu0 %v455
    %476 = vmatprep.subr.bf16.mxu0 0
    %477 = vmatpush1.bf16.msra.mxu0 %v456
    %478 = vmatprep.subr.bf16.mxu0 0
    %479 = vmatpush1.bf16.msra.mxu0 %v457
    %480 = vmatprep.subr.bf16.mxu0 0
    %481 = vmatpush1.bf16.msra.mxu0 %v458
    %482 = vmatprep.subr.bf16.mxu0 0
    %483 = vmatpush1.bf16.msra.mxu0 %v459
    %484 = vmatprep.subr.bf16.mxu0 0
    %485 = vmatpush1.bf16.msra.mxu0 0
    %486 = vmatprep.subr.bf16.mxu0 0
    %487 = vmatpush1.bf16.msra.mxu0 0
    %488 = vmatprep.subr.bf16.mxu0 0
    %489 = vmatpush1.bf16.msra.mxu0 0
    %490 = vmatprep.subr.bf16.mxu0 0
    %491 = vmatpush1.bf16.msra.mxu0 0
    %492 = vmatprep.subr.bf16.mxu0 0
    %493 = vmatpush1.bf16.msra.mxu0 0
    %494 = vmatprep.subr.bf16.mxu0 0
    %495 = vmatpush1.bf16.msra.mxu0 0
    %496 = vmatprep.subr.bf16.mxu0 0
    %497 = vmatpush1.bf16.msra.mxu0 0
    %498 = vmatprep.subr.bf16.mxu0 0
    %499 = vmatpush1.bf16.msra.mxu0 0
    %500 = vmatprep.mubr.bf16.mxu0 0
    %501 = vmatmul.mubr.bf16.gmra.mrb[0].mxu0 %v396
    %v502 = vpop.f32.mrb[0].mxu0
    %v503 = vadd.f32 %v418, %v502
    %v504 = vpop.f32.mrb[0].mxu0
    %v505 = vpop.f32.mrb[0].mxu0
    %v506 = vpop.f32.mrb[0].mxu0
    %507 = vdwg.mxu0
    %v508 = vand.u32 2147483647, %v503
    %v509 = vsub.f32 0.0, %v508
    %v510 = vmul.f32 %v509, 1.442695
    %v511 = vpow.pop %v510
    %v512 = vadd.f32 %v511, 1.0
    %v513 = vrcp.pop %v512
    %v514 = vmul.f32 %v511, %v513
    %vm515 = vcmp.ge.f32.partialorder %v503, 0.0
    %v516 = vsub.f32 1.0, %v514
    %v517 = vsel %vm515, %v516, %v514
    %vm518 = vcmask 277504
    %519 = vst.msk [vmem:[#allocation5] sm:$0xff] %vm518, %v517
    // Predicated region
    $region26: #{_speaker_forward.1} parent=1 // pred_check
      _
    $region27: #{_speaker_forward.1} parent=1 // pred_check_branch
      %521 = sbr.rel (0) target = $region29
    $region28: #{_speaker_forward.1} parent=1 // pred_region
      %s523 = ssub.s32 128, 128
      %524 = vsyncadd [#allocation4], %s523
      %s526 = sshll.u32 [#allocation5], 4
      %s527 = int_to_ptr.vmem [resolvable:$true] %s526
      %529 = dma.vmem_to_hbm [thread:$0]  %s527, 128, %s5, [#allocation4]
    $region29: #{_speaker_forward.1} parent=1 // pred_fallthru
      _
    // Predicated region
    $region30: #{_speaker_forward.1} parent=1 // pred_check
      _
    $region31: #{_speaker_forward.1} parent=1 // pred_check_branch
      %531 = sbr.rel (0) target = $region33
    $region32: #{_speaker_forward.1} parent=1 // pred_region
      %532 = dma.done [#allocation4], 128
    $region33: #{_speaker_forward.1} parent=1 // pred_fallthru
      _
    %533 = vsyncpa [#allocation3], 1
    %534 = vsyncpa [#allocation4], 1

</llo_original>
